<compile_context>
chip_gen: v5e
topology: v5e:2x2
jax: 0.10.0
libtpu: 0.0.40
codegen_flags: <defaults>
</compile_context>

<pallas_src>
import functools
import math

import jax
import jax.numpy as jnp
from jax.experimental import pallas as pl
from jax.experimental.pallas import tpu as pltpu

_NEG_INF = -1e30
_VMEM_LIMIT_BYTES = 48 * 1024 * 1024   # comfortably inside v7x's 64 MiB VMEM


def _round_up(x, m):
    return ((x + m - 1) // m) * m


def _pad_to(a, shape):
    return jnp.pad(a, [(0, t - s) for s, t in zip(a.shape, shape)])


# --------------------------- kernels ---------------------------------------


def _adagnn_layer1_kernel(adj_ref, x_all_ref, x_row_ref, d1_ref, w1_ref, b1_ref,
                          h_f32_ref, h_mm_ref):
    """h[rows] = relu((x[rows] - (adj[rows, :] @ x) * (d1 + 1)) @ W1 + b1).

    Emits h both in f32 (exact residual operand for layer 2) and in the matmul
    dtype (operand for layer 2's adj @ h), so layer 2 never re-casts the full
    hidden matrix per grid step.
    """
    e1 = jnp.dot(adj_ref[...], x_all_ref[...],
                 preferred_element_type=jnp.float32)           # (tm, Fp) f32
    e4 = x_row_ref[...] - e1 * (d1_ref[...] + 1.0)             # f32 elementwise
    h = jnp.dot(e4.astype(w1_ref.dtype), w1_ref[...],
                preferred_element_type=jnp.float32)            # (tm, Hp) f32
    h = jnp.maximum(h + b1_ref[...], 0.0)
    h_f32_ref[...] = h
    h_mm_ref[...] = h.astype(h_mm_ref.dtype)


def _adagnn_layer2_kernel(adj_ref, h_all_ref, h_row_ref, d2_ref, w2_ref, b2_ref,
                          out_ref, *, nclass):
    """out[rows] = log_softmax((h[rows] - (adj[rows,:] @ h)*(d2+1)) @ W2 + b2)."""
    e1 = jnp.dot(adj_ref[...], h_all_ref[...],
                 preferred_element_type=jnp.float32)           # (tm, Hp) f32
    e4 = h_row_ref[...] - e1 * (d2_ref[...] + 1.0)
    z = jnp.dot(e4.astype(w2_ref.dtype), w2_ref[...],
                preferred_element_type=jnp.float32) + b2_ref[...]  # (tm, Cp)
    # Mask padded class lanes so max / logsumexp only see real classes.
    lane = jax.lax.broadcasted_iota(jnp.int32, z.shape, 1)
    z = jnp.where(lane < nclass, z, _NEG_INF)
    m = jnp.max(z, axis=1, keepdims=True)
    s = z - m
    lse = jnp.log(jnp.sum(jnp.exp(s), axis=1, keepdims=True))
    out_ref[...] = s - lse


# --------------------------- wrapper ----------------------------------------


def adagnn_forward(l_sym, x, d1, w1, b1, d2, w2, b2, *, use_bf16=True,
                   row_tile=256):
    """AdaGNN (nlayer=2, eval mode) forward via two Pallas TPU kernels."""
    N, nfeat = x.shape
    nhid = w1.shape[1]
    nclass = w2.shape[1]

    # Row tile (sublane axis) and lane-padded feature widths.
    tm = min(row_tile, _round_up(N, 8))
    Np = _round_up(N, tm)
    Fp = _round_up(nfeat, 128)
    Hp = _round_up(nhid, 128)
    Cp = _round_up(nclass, 128)
    nb = Np // tm

    mm_dtype = jnp.bfloat16 if use_bf16 else jnp.float32

    # Zero padding is inert: padded adj rows/cols and padded feature lanes are
    # zero, padded diag entries scale zeros, padded weight rows/cols are zero.
    adj_p = _pad_to(l_sym, (Np, Np)).astype(mm_dtype)
    x_f32 = _pad_to(x, (Np, Fp)).astype(jnp.float32)
    x_mm = x_f32.astype(mm_dtype)            # hoisted cast for adj @ x operand
    d1_p = _pad_to(d1, (1, Fp)).astype(jnp.float32)
    w1_p = _pad_to(w1, (Fp, Hp)).astype(mm_dtype)
    b1_p = _pad_to(b1, (1, Hp)).astype(jnp.float32)
    d2_p = _pad_to(d2, (1, Hp)).astype(jnp.float32)
    w2_p = _pad_to(w2, (Hp, Cp)).astype(mm_dtype)
    b2_p = _pad_to(b2, (1, Cp)).astype(jnp.float32)

    nbytes = lambda a: a.size * a.dtype.itemsize
    mm_bytes = 2 if use_bf16 else 4
    compiler_params = pltpu.CompilerParams(
        dimension_semantics=("parallel",),     # row blocks are independent
        vmem_limit_bytes=_VMEM_LIMIT_BYTES)

    row_block = lambda i: (i, 0)
    whole = lambda i: (0, 0)

    # ---- layer 1: (Np, Fp) -> (Np, Hp) f32 + (Np, Hp) mm_dtype --------------
    h_f32, h_mm = pl.pallas_call(
        _adagnn_layer1_kernel,
        out_shape=(jax.ShapeDtypeStruct((Np, Hp), jnp.float32),
                   jax.ShapeDtypeStruct((Np, Hp), mm_dtype)),
        grid=(nb,),
        in_specs=[
            pl.BlockSpec((tm, Np), row_block),   # adj row block (mm_dtype)
            pl.BlockSpec((Np, Fp), whole),       # full x (mm_dtype, for adj @ x)
            pl.BlockSpec((tm, Fp), row_block),   # this block's x rows (f32)
            pl.BlockSpec((1, Fp), whole),        # d1
            pl.BlockSpec((Fp, Hp), whole),       # W1
            pl.BlockSpec((1, Hp), whole),        # b1
        ],
        out_specs=[pl.BlockSpec((tm, Hp), row_block),
                   pl.BlockSpec((tm, Hp), row_block)],
        compiler_params=compiler_params,
        cost_estimate=pl.CostEstimate(
            flops=2 * Np * Np * Fp + 2 * Np * Fp * Hp,
            transcendentals=0,
            bytes_accessed=nbytes(adj_p) + nbytes(x_mm) + nbytes(x_f32)
                           + nbytes(w1_p) + Np * Hp * (4 + mm_bytes)),
    )(adj_p, x_mm, x_f32, d1_p, w1_p, b1_p)

    # F.dropout(training=False) is the identity.
    # TODO(synk): training-mode dropout would need pltpu.prng_seed /
    # prng_random_bits plus a seed input; not part of the eval forward pass.

    # ---- layer 2 + log_softmax: (Np, Hp) -> (Np, Cp) ------------------------
    out_p = pl.pallas_call(
        functools.partial(_adagnn_layer2_kernel, nclass=nclass),
        out_shape=jax.ShapeDtypeStruct((Np, Cp), jnp.float32),
        grid=(nb,),
        in_specs=[
            pl.BlockSpec((tm, Np), row_block),   # adj row block (mm_dtype)
            pl.BlockSpec((Np, Hp), whole),       # full h (mm_dtype, for adj @ h)
            pl.BlockSpec((tm, Hp), row_block),   # this block's h rows (f32)
            pl.BlockSpec((1, Hp), whole),        # d2
            pl.BlockSpec((Hp, Cp), whole),       # W2
            pl.BlockSpec((1, Cp), whole),        # b2
        ],
        out_specs=pl.BlockSpec((tm, Cp), row_block),
        compiler_params=compiler_params,
        cost_estimate=pl.CostEstimate(
            flops=2 * Np * Np * Hp + 2 * Np * Hp * Cp,
            transcendentals=Np * Cp + Np,
            bytes_accessed=nbytes(adj_p) + Np * Hp * (4 + mm_bytes)
                           + nbytes(w2_p) + Np * Cp * 4),
    )(adj_p, h_mm, h_f32, d2_p, w2_p, b2_p)

    # Drop padded rows / padded class lanes.
    return out_p[:N, :nclass]


# --------------------------- reference --------------------------------------


def reference_forward(l_sym, x, d1, w1, b1, d2, w2, b2, *, use_bf16=True):
    """Plain-JAX reference mirroring the PyTorch module (eval mode), with the
    same matmul-operand precision as the kernel (bf16 inputs, f32 accum)."""
    mm_dtype = jnp.bfloat16 if use_bf16 else jnp.float32

    def mm(a, b):
        return jnp.dot(a.astype(mm_dtype), b.astype(mm_dtype),
                       preferred_element_type=jnp.float32)

    e1 = mm(l_sym, x)
    e4 = x - e1 * (d1 + 1.0)
    h = jnp.maximum(mm(e4, w1) + b1, 0.0)
    e1b = mm(l_sym, h)
    e4b = h - e1b * (d2 + 1.0)
    z = mm(e4b, w2) + b2
    return jax.nn.log_softmax(z, axis=1)


# --------------------------- demo / self-test --------------------------------


if __name__ == "__main__":
    # Small, deterministic problem: 64 nodes, nfeat=16, nhid=32, nclass=8.
    N, nfeat, nhid, nclass = 64, 16, 32, 8
    key = jax.random.PRNGKey(0)
    k_adj, k_x, k_w1, k_b1, k_d1, k_w2, k_b2, k_d2 = jax.random.split(key, 8)

    # Inputs (x = node features, l_sym = symmetric propagation operator).
    x = jax.random.normal(k_x, (N, nfeat), dtype=jnp.float32)
    a = jax.random.normal(k_adj, (N, N), dtype=jnp.float32) * 0.1
    l_sym = (a + a.T) * 0.5

    # Parameter init mirroring AdagnnWith.reset_parameters (deterministic).
    stdv1 = 1.0 / math.sqrt(nhid)
    w1 = jax.random.uniform(k_w1, (nfeat, nhid), jnp.float32, -stdv1, stdv1)
    b1 = jax.random.uniform(k_b1, (1, nhid), jnp.float32, -stdv1, stdv1)
    d1 = 0.01 * jax.random.normal(k_d1, (1, nfeat), dtype=jnp.float32)

    stdv2 = 1.0 / math.sqrt(nclass)
    w2 = jax.random.uniform(k_w2, (nhid, nclass), jnp.float32, -stdv2, stdv2)
    b2 = jax.random.uniform(k_b2, (1, nclass), jnp.float32, -stdv2, stdv2)
    d2 = 0.01 * jax.random.normal(k_d2, (1, nhid), dtype=jnp.float32)

    out = adagnn_forward(l_sym, x, d1, w1, b1, d2, w2, b2, use_bf16=True)
    out = jax.block_until_ready(out)

    ref = reference_forward(l_sym, x, d1, w1, b1, d2, w2, b2, use_bf16=True)
    assert out.shape == (N, nclass)
    assert bool(jnp.allclose(out, ref, atol=5e-3, rtol=5e-3)), \
        "mismatch vs reference"

    print("KERNEL_OK")
</pallas_src>

<mosaic_0001>
module attributes {stable_mosaic.version = 11 : i64} {
  func.func @_adagnn_layer1_kernel(%arg0: i32, %arg1: memref<64x64xbf16, #tpu.memory_space<vmem>>, %arg2: memref<64x128xbf16, #tpu.memory_space<vmem>>, %arg3: memref<64x128xf32, #tpu.memory_space<vmem>>, %arg4: memref<1x128xf32, #tpu.memory_space<vmem>>, %arg5: memref<128x128xbf16, #tpu.memory_space<vmem>>, %arg6: memref<1x128xf32, #tpu.memory_space<vmem>>, %arg7: memref<64x128xf32, #tpu.memory_space<vmem>>, %arg8: memref<64x128xbf16, #tpu.memory_space<vmem>>) attributes {dimension_semantics = [#tpu.dimension_semantics<parallel>], iteration_bounds = array<i64: 1>, scalar_prefetch = 0 : i64, scratch_operands = 0 : i64, tpu.core_type = #tpu.core_type<tc>, window_params = [{transform_indices = @transform_0, window_bounds = array<i64: 64, 64>}, {pipeline_mode = #tpu.pipeline_mode<synchronous>, transform_indices = @transform_1, window_bounds = array<i64: 64, 128>}, {transform_indices = @transform_2, window_bounds = array<i64: 64, 128>}, {pipeline_mode = #tpu.pipeline_mode<synchronous>, transform_indices = @transform_3, window_bounds = array<i64: 1, 128>}, {pipeline_mode = #tpu.pipeline_mode<synchronous>, transform_indices = @transform_4, window_bounds = array<i64: 128, 128>}, {pipeline_mode = #tpu.pipeline_mode<synchronous>, transform_indices = @transform_5, window_bounds = array<i64: 1, 128>}, {transform_indices = @transform_6, window_bounds = array<i64: 64, 128>}, {transform_indices = @transform_7, window_bounds = array<i64: 64, 128>}]} {
    %c0 = arith.constant 0 : index
    %c0_0 = arith.constant 0 : index
    %0 = vector.load %arg1[%c0, %c0_0] : memref<64x64xbf16, #tpu.memory_space<vmem>>, vector<64x64xbf16>
    %c0_1 = arith.constant 0 : index
    %c0_2 = arith.constant 0 : index
    %1 = vector.load %arg2[%c0_1, %c0_2] : memref<64x128xbf16, #tpu.memory_space<vmem>>, vector<64x128xbf16>
    %cst = arith.constant dense<0.000000e+00> : vector<64x128xf32>
    %2 = tpu.matmul %0, %1, %cst {dimension_numbers = #tpu.dot_dimension_numbers<[1], [0], [0], [1], [0, 0, 1, 1], [], []>} : vector<64x64xbf16>, vector<64x128xbf16>, vector<64x128xf32> -> vector<64x128xf32>
    %c0_3 = arith.constant 0 : index
    %c0_4 = arith.constant 0 : index
    %3 = vector.load %arg3[%c0_3, %c0_4] : memref<64x128xf32, #tpu.memory_space<vmem>>, vector<64x128xf32>
    %c0_5 = arith.constant 0 : index
    %c0_6 = arith.constant 0 : index
    %4 = vector.load %arg4[%c0_5, %c0_6] : memref<1x128xf32, #tpu.memory_space<vmem>>, vector<1x128xf32>
    %cst_7 = arith.constant 1.000000e+00 : f32
    %5 = vector.broadcast %cst_7 : f32 to vector<1x128xf32>
    %6 = arith.addf %4, %5 : vector<1x128xf32>
    %7 = vector.broadcast %6 : vector<1x128xf32> to vector<64x128xf32>
    %8 = arith.mulf %2, %7 : vector<64x128xf32>
    %9 = arith.subf %3, %8 : vector<64x128xf32>
    %10 = arith.truncf %9 : vector<64x128xf32> to vector<64x128xbf16>
    %c0_8 = arith.constant 0 : index
    %c0_9 = arith.constant 0 : index
    %11 = vector.load %arg5[%c0_8, %c0_9] : memref<128x128xbf16, #tpu.memory_space<vmem>>, vector<128x128xbf16>
    %cst_10 = arith.constant dense<0.000000e+00> : vector<64x128xf32>
    %12 = tpu.matmul %10, %11, %cst_10 {dimension_numbers = #tpu.dot_dimension_numbers<[1], [0], [0], [1], [0, 0, 1, 1], [], []>} : vector<64x128xbf16>, vector<128x128xbf16>, vector<64x128xf32> -> vector<64x128xf32>
    %c0_11 = arith.constant 0 : index
    %c0_12 = arith.constant 0 : index
    %13 = vector.load %arg6[%c0_11, %c0_12] : memref<1x128xf32, #tpu.memory_space<vmem>>, vector<1x128xf32>
    %14 = vector.broadcast %13 : vector<1x128xf32> to vector<64x128xf32>
    %15 = arith.addf %12, %14 : vector<64x128xf32>
    %cst_13 = arith.constant 0.000000e+00 : f32
    %16 = vector.broadcast %cst_13 : f32 to vector<64x128xf32>
    %17 = arith.maximumf %15, %16 : vector<64x128xf32>
    %c0_14 = arith.constant 0 : index
    %c0_15 = arith.constant 0 : index
    %18 = vector.load %arg7[%c0_14, %c0_15] : memref<64x128xf32, #tpu.memory_space<vmem>>, vector<64x128xf32>
    tpu.vector_store %arg7[%c0_14, %c0_15], %17 {strides = array<i32>} : memref<64x128xf32, #tpu.memory_space<vmem>>, vector<64x128xf32>,
    %19 = arith.truncf %17 : vector<64x128xf32> to vector<64x128xbf16>
    %c0_16 = arith.constant 0 : index
    %c0_17 = arith.constant 0 : index
    %20 = vector.load %arg8[%c0_16, %c0_17] : memref<64x128xbf16, #tpu.memory_space<vmem>>, vector<64x128xbf16>
    tpu.vector_store %arg8[%c0_16, %c0_17], %19 {strides = array<i32>} : memref<64x128xbf16, #tpu.memory_space<vmem>>, vector<64x128xbf16>,
    return
  }
  func.func @transform_0(%arg0: i32) -> (i32, i32) {
    %c0_i32 = arith.constant 0 : i32
    %c0_i32_0 = arith.constant 0 : i32
    return %arg0, %c0_i32 : i32, i32
  }
  func.func @transform_1(%arg0: i32) -> (i32, i32) {
    %c0_i32 = arith.constant 0 : i32
    %c0_i32_0 = arith.constant 0 : i32
    %c0_i32_1 = arith.constant 0 : i32
    return %c0_i32, %c0_i32_0 : i32, i32
  }
  func.func @transform_2(%arg0: i32) -> (i32, i32) {
    %c0_i32 = arith.constant 0 : i32
    %c0_i32_0 = arith.constant 0 : i32
    return %arg0, %c0_i32 : i32, i32
  }
  func.func @transform_3(%arg0: i32) -> (i32, i32) {
    %c0_i32 = arith.constant 0 : i32
    %c0_i32_0 = arith.constant 0 : i32
    %c0_i32_1 = arith.constant 0 : i32
    return %c0_i32, %c0_i32_0 : i32, i32
  }
  func.func @transform_4(%arg0: i32) -> (i32, i32) {
    %c0_i32 = arith.constant 0 : i32
    %c0_i32_0 = arith.constant 0 : i32
    %c0_i32_1 = arith.constant 0 : i32
    return %c0_i32, %c0_i32_0 : i32, i32
  }
  func.func @transform_5(%arg0: i32) -> (i32, i32) {
    %c0_i32 = arith.constant 0 : i32
    %c0_i32_0 = arith.constant 0 : i32
    %c0_i32_1 = arith.constant 0 : i32
    return %c0_i32, %c0_i32_0 : i32, i32
  }
  func.func @transform_6(%arg0: i32) -> (i32, i32) {
    %c0_i32 = arith.constant 0 : i32
    %c0_i32_0 = arith.constant 0 : i32
    return %arg0, %c0_i32 : i32, i32
  }
  func.func @transform_7(%arg0: i32) -> (i32, i32) {
    %c0_i32 = arith.constant 0 : i32
    %c0_i32_0 = arith.constant 0 : i32
    return %arg0, %c0_i32 : i32, i32
  }
}

</mosaic_0001>

<llo_original>
// kernel: tpu_custom_call.1
$region0: #{tpu_custom_call.1}
  #allocation0 [shape = 'u32[]', space=smem, size = 0x4, offset = 0x4, fixed_abs, tag = 'smem constant byte address 0x4 - core index']
  #allocation1 [shape = 'u32[72,128]{1,0:T(1,128)}', space=vmem, size = 0x9000, scoped, tag = 'internal scratch']
  %s0 = inlined_call_operand.hbm [shape: bf16[64,64], index: 0, kind: input, shape index: {}]
  %s1 = inlined_call_operand.hbm [shape: bf16[64,128], index: 1, kind: input, shape index: {}]
  %s2 = inlined_call_operand.hbm [shape: f32[64,128], index: 2, kind: input, shape index: {}]
  %s3 = inlined_call_operand.vmem [shape: f32[1,128], index: 3, kind: input, shape index: {}]
  %s4 = inlined_call_operand.hbm [shape: bf16[128,128], index: 4, kind: input, shape index: {}]
  %s5 = inlined_call_operand.vmem [shape: f32[1,128], index: 5, kind: input, shape index: {}]
  %s6 = inlined_call_operand.hbm [shape: f32[64,128], index: 6, kind: output, shape index: {0}]
  %s7 = inlined_call_operand.hbm [shape: bf16[64,128], index: 7, kind: output, shape index: {1}]
  %8 = xla_tuple %s6, %s7
  %s9 = sld [smem:[#allocation0]]
  $region58: #{tpu_custom_call.1} parent=0
    _
  %s11 = ssub.s32 1, %s9
  %s12 = scalar_select 0, %s11, %s9
  $region1: #{tpu_custom_call.1} parent=0
    #allocation2 [shape = 'u8[16384]{0}', space=vmem, size = 0x4000, scoped, tag = 'input window, operand 0, single buffered']
    #allocation3 [shape = 's32[1]{0}', space=sflag, size = 0x4, scoped, tag = 'scoped memory for tpu_custom_call.1']
    #allocation4 [shape = 's32[1]{0}', space=sflag, size = 0x4, scoped, tag = 'scoped memory for tpu_custom_call.1']
    #allocation5 [shape = 'u8[16384]{0}', space=vmem, size = 0x4000, scoped, tag = 'input window, operand 1, single buffered']
    #allocation6 [shape = 's32[1]{0}', space=sflag, size = 0x4, scoped, tag = 'scoped memory for tpu_custom_call.1']
    #allocation7 [shape = 'u8[32768]{0}', space=vmem, size = 0x8000, scoped, tag = 'input window, operand 2, single buffered']
    #allocation8 [shape = 'u8[32768]{0}', space=vmem, size = 0x8000, scoped, tag = 'input window, operand 4, single buffered']
    #allocation9 [shape = 's32[1]{0}', space=sflag, size = 0x4, scoped, tag = 'scoped memory for tpu_custom_call.1']
    #allocation10 [shape = 'u8[32768]{0}', space=vmem, size = 0x8000, scoped, tag = 'output window, operand 0, single buffered']
    #allocation11 [shape = 'u8[16384]{0}', space=vmem, size = 0x4000, scoped, tag = 'output window, operand 1, single buffered']
    #allocation12 [shape = 's32[1]{0}', space=sflag, size = 0x4, scoped, tag = 'scoped memory for tpu_custom_call.1']
    %13 = vsyncpa [#allocation3], 0
    %14 = vsyncpa [#allocation6], 0
    %15 = vsyncpa [#allocation9], 0
    %16 = vsyncpa [#allocation4], 0
    %17 = vsyncpa [#allocation12], 0
    // Predicated region
    $region2: #{tpu_custom_call.1} parent=1 // pred_check
      _
    $region3: #{tpu_custom_call.1} parent=1 // pred_check_branch
      %19 = sbr.rel (0) target = $region5
    $region4: #{tpu_custom_call.1} parent=1 // pred_region
      %21 = vsyncadd [#allocation3], 0
      %s22 = sshll.u32 %s0, 4
      %s23 = int_to_ptr.hbm [resolvable:$true] %s22
      %s24 = sshll.u32 [#allocation2], 4
      %s25 = int_to_ptr.vmem [resolvable:$true] %s24
      %30 = dma.hbm_to_vmem [thread:$0]  %s23, 512, %s25, [#allocation3], 64, 64, 4
    $region5: #{tpu_custom_call.1} parent=1 // pred_fallthru
      _
    // Predicated region
    $region6: #{tpu_custom_call.1} parent=1 // pred_check
      _
    $region7: #{tpu_custom_call.1} parent=1 // pred_check_branch
      %32 = sbr.rel (0) target = $region9
    $region8: #{tpu_custom_call.1} parent=1 // pred_region
      %34 = vsyncadd [#allocation6], 0
      %s35 = sshll.u32 %s1, 4
      %s36 = int_to_ptr.hbm [resolvable:$true] %s35
      %s37 = sshll.u32 [#allocation5], 4
      %s38 = int_to_ptr.vmem [resolvable:$true] %s37
      %43 = dma.hbm_to_vmem [thread:$0]  %s36, 512, %s38, [#allocation6], 64, 64, 4
    $region9: #{tpu_custom_call.1} parent=1 // pred_fallthru
      _
    // Predicated region
    $region10: #{tpu_custom_call.1} parent=1 // pred_check
      _
    $region11: #{tpu_custom_call.1} parent=1 // pred_check_branch
      %45 = sbr.rel (0) target = $region13
    $region12: #{tpu_custom_call.1} parent=1 // pred_region
      %47 = vsyncadd [#allocation6], 0
      %s48 = sshll.u32 %s2, 4
      %s49 = int_to_ptr.hbm [resolvable:$true] %s48
      %s50 = sshll.u32 [#allocation7], 4
      %s51 = int_to_ptr.vmem [resolvable:$true] %s50
      %56 = dma.hbm_to_vmem [thread:$0]  %s49, 1024, %s51, [#allocation6], 128, 128, 8
    $region13: #{tpu_custom_call.1} parent=1 // pred_fallthru
      _
    // Predicated region
    $region14: #{tpu_custom_call.1} parent=1 // pred_check
      _
    $region15: #{tpu_custom_call.1} parent=1 // pred_check_branch
      %58 = sbr.rel (0) target = $region17
    $region16: #{tpu_custom_call.1} parent=1 // pred_region
      _
    $region17: #{tpu_custom_call.1} parent=1 // pred_fallthru
      _
    // Predicated region
    $region18: #{tpu_custom_call.1} parent=1 // pred_check
      _
    $region19: #{tpu_custom_call.1} parent=1 // pred_check_branch
      %60 = sbr.rel (0) target = $region21
    $region20: #{tpu_custom_call.1} parent=1 // pred_region
      %62 = vsyncadd [#allocation9], 0
      %s63 = sshll.u32 %s4, 4
      %s64 = int_to_ptr.hbm [resolvable:$true] %s63
      %s65 = sshll.u32 [#allocation8], 4
      %s66 = int_to_ptr.vmem [resolvable:$true] %s65
      %71 = dma.hbm_to_vmem [thread:$0]  %s64, 1024, %s66, [#allocation9], 64, 64, 4
    $region21: #{tpu_custom_call.1} parent=1 // pred_fallthru
      _
    // Predicated region
    $region22: #{tpu_custom_call.1} parent=1 // pred_check
      _
    $region23: #{tpu_custom_call.1} parent=1 // pred_check_branch
      %73 = sbr.rel (0) target = $region25
    $region24: #{tpu_custom_call.1} parent=1 // pred_region
      _
    $region25: #{tpu_custom_call.1} parent=1 // pred_fallthru
      _
    // Predicated region
    $region26: #{tpu_custom_call.1} parent=1 // pred_check
      _
    $region27: #{tpu_custom_call.1} parent=1 // pred_check_branch
      %75 = sbr.rel (0) target = $region29
    $region28: #{tpu_custom_call.1} parent=1 // pred_region
      %77 = dma.done [#allocation3], 512
    $region29: #{tpu_custom_call.1} parent=1 // pred_fallthru
      _
    // Predicated region
    $region30: #{tpu_custom_call.1} parent=1 // pred_check
      _
    $region31: #{tpu_custom_call.1} parent=1 // pred_check_branch
      %79 = sbr.rel (0) target = $region33
    $region32: #{tpu_custom_call.1} parent=1 // pred_region
      %81 = dma.done [#allocation6], 512
    $region33: #{tpu_custom_call.1} parent=1 // pred_fallthru
      _
    // Predicated region
    $region34: #{tpu_custom_call.1} parent=1 // pred_check
      _
    $region35: #{tpu_custom_call.1} parent=1 // pred_check_branch
      %83 = sbr.rel (0) target = $region37
    $region36: #{tpu_custom_call.1} parent=1 // pred_region
      %85 = dma.done [#allocation6], 1024
    $region37: #{tpu_custom_call.1} parent=1 // pred_fallthru
      _
    // Predicated region
    $region38: #{tpu_custom_call.1} parent=1 // pred_check
      _
    $region39: #{tpu_custom_call.1} parent=1 // pred_check_branch
      %87 = sbr.rel (0) target = $region41
    $region40: #{tpu_custom_call.1} parent=1 // pred_region
      %89 = dma.done [#allocation9], 1024
    $region41: #{tpu_custom_call.1} parent=1 // pred_fallthru
      _
    %v91 = vld [vmem:[#allocation2] sm:$0xf]
    %v92 = vld [vmem:[#allocation2 + $0x4] sm:$0xf]
    %v93 = vld [vmem:[#allocation2 + $0x8] sm:$0xf]
    %v94 = vld [vmem:[#allocation2 + $0xc] sm:$0xf]
    %v95 = vld [vmem:[#allocation2 + $0x10] sm:$0xf]
    %v96 = vld [vmem:[#allocation2 + $0x14] sm:$0xf]
    %v97 = vld [vmem:[#allocation2 + $0x18] sm:$0xf]
    %v98 = vld [vmem:[#allocation2 + $0x1c] sm:$0xf]
    %v99 = vld [vmem:[#allocation5] sm:$0xf]
    %v100 = vld [vmem:[#allocation5 + $0x4] sm:$0xf]
    %v101 = vld [vmem:[#allocation5 + $0x8] sm:$0xf]
    %v102 = vld [vmem:[#allocation5 + $0xc] sm:$0xf]
    %v103 = vld [vmem:[#allocation5 + $0x10] sm:$0xf]
    %v104 = vld [vmem:[#allocation5 + $0x14] sm:$0xf]
    %v105 = vld [vmem:[#allocation5 + $0x18] sm:$0xf]
    %v106 = vld [vmem:[#allocation5 + $0x1c] sm:$0xf]
    %v115 = vunpack.c.l.b16 %v91
    %v116 = vunpack.c.l.b16 %v92
    %v117 = vunpack.c.l.b16 %v93
    %v118 = vunpack.c.l.b16 %v94
    %v119 = vunpack.c.l.b16 %v95
    %v120 = vunpack.c.l.b16 %v96
    %v121 = vunpack.c.l.b16 %v97
    %v122 = vunpack.c.l.b16 %v98
    %v123 = vpack.c.b16 %v116, %v115
    %v124 = vpack.c.b16 %v118, %v117
    %v125 = vpack.c.b16 %v120, %v119
    %v126 = vpack.c.b16 %v122, %v121
    %v135 = vunpack.c.l.b16 %v99
    %v136 = vunpack.c.l.b16 %v100
    %v137 = vunpack.c.l.b16 %v101
    %v138 = vunpack.c.l.b16 %v102
    %v139 = vunpack.c.l.b16 %v103
    %v140 = vunpack.c.l.b16 %v104
    %v141 = vunpack.c.l.b16 %v105
    %v142 = vunpack.c.l.b16 %v106
    %v143 = vpack.c.b16 %v136, %v135
    %v144 = vpack.c.b16 %v138, %v137
    %v145 = vpack.c.b16 %v140, %v139
    %v146 = vpack.c.b16 %v142, %v141
    %vm151 = vcmask 523264
    %v153 = vsel %vm151, %v123, 0
    %v156 = vsel %vm151, %v124, 0
    %v159 = vsel %vm151, %v125, 0
    %v162 = vsel %vm151, %v126, 0
    %164 = vmatpush.bf16.msra.mxu0 0
    %165 = vmatpush.bf16.msra.mxu0 0
    %166 = vmatpush.bf16.msra.mxu0 0
    %167 = vmatpush.bf16.msra.mxu0 0
    %168 = vmatpush.bf16.msra.mxu0 %v146
    %169 = vmatpush.bf16.msra.mxu0 %v145
    %170 = vmatpush.bf16.msra.mxu0 %v144
    %171 = vmatpush.bf16.msra.mxu0 %v143
    %172 = vmatmul.bf16.gmra.mxu0 %v153
    %v173 = vpop.f32.mrf.mxu0
    %v174 = vadd.f32 0.0, %v173
    %v175 = vpop.f32.mrf.mxu0
    %v176 = vadd.f32 0.0, %v175
    %177 = vmatmul.bf16.gmra.mxu0 %v156
    %v178 = vpop.f32.mrf.mxu0
    %v179 = vadd.f32 0.0, %v178
    %v180 = vpop.f32.mrf.mxu0
    %v181 = vadd.f32 0.0, %v180
    %182 = vmatmul.bf16.gmra.mxu0 %v159
    %v183 = vpop.f32.mrf.mxu0
    %v184 = vadd.f32 0.0, %v183
    %v185 = vpop.f32.mrf.mxu0
    %v186 = vadd.f32 0.0, %v185
    %187 = vmatmul.bf16.gmra.mxu0 %v162
    %v188 = vpop.f32.mrf.mxu0
    %v189 = vadd.f32 0.0, %v188
    %v190 = vpop.f32.mrf.mxu0
    %v191 = vadd.f32 0.0, %v190
    %192 = vdwg.mxu0
    %v193 = vld [vmem:[#allocation7] sm:$0xff]
    %v194 = vld [vmem:[#allocation7 + $0x8] sm:$0xff]
    %v195 = vld [vmem:[#allocation7 + $0x10] sm:$0xff]
    %v196 = vld [vmem:[#allocation7 + $0x18] sm:$0xff]
    %v197 = vld [vmem:[#allocation7 + $0x20] sm:$0xff]
    %v198 = vld [vmem:[#allocation7 + $0x28] sm:$0xff]
    %v199 = vld [vmem:[#allocation7 + $0x30] sm:$0xff]
    %v200 = vld [vmem:[#allocation7 + $0x38] sm:$0xff]
    %v201 = vld [vmem:[%s3] sm:$0x1]
    %v202 = vadd.f32 %v201, 1.0
    %v204 = vperm.slane %v202, 0
    %v206 = vmul.f32 %v174, %v204
    %v207 = vmul.f32 %v176, %v204
    %v208 = vmul.f32 %v179, %v204
    %v209 = vmul.f32 %v181, %v204
    %v210 = vmul.f32 %v184, %v204
    %v211 = vmul.f32 %v186, %v204
    %v212 = vmul.f32 %v189, %v204
    %v213 = vmul.f32 %v191, %v204
    %v214 = vsub.f32 %v193, %v206
    %v215 = vsub.f32 %v194, %v207
    %v216 = vsub.f32 %v195, %v208
    %v217 = vsub.f32 %v196, %v209
    %v218 = vsub.f32 %v197, %v210
    %v219 = vsub.f32 %v198, %v211
    %v220 = vsub.f32 %v199, %v212
    %v221 = vsub.f32 %v200, %v213
    %v222 = vpack.c.bf16 %v215, %v214
    %v223 = vpack.c.bf16 %v217, %v216
    %v224 = vpack.c.bf16 %v219, %v218
    %v225 = vpack.c.bf16 %v221, %v220
    %v226 = vld [vmem:[#allocation8] sm:$0xf]
    %v227 = vld [vmem:[#allocation8 + $0x4] sm:$0xf]
    %v228 = vld [vmem:[#allocation8 + $0x8] sm:$0xf]
    %v229 = vld [vmem:[#allocation8 + $0xc] sm:$0xf]
    %v230 = vld [vmem:[#allocation8 + $0x10] sm:$0xf]
    %v231 = vld [vmem:[#allocation8 + $0x14] sm:$0xf]
    %v232 = vld [vmem:[#allocation8 + $0x18] sm:$0xf]
    %v233 = vld [vmem:[#allocation8 + $0x1c] sm:$0xf]
    %v234 = vld [vmem:[#allocation8 + $0x20] sm:$0xf]
    %v235 = vld [vmem:[#allocation8 + $0x24] sm:$0xf]
    %v236 = vld [vmem:[#allocation8 + $0x28] sm:$0xf]
    %v237 = vld [vmem:[#allocation8 + $0x2c] sm:$0xf]
    %v238 = vld [vmem:[#allocation8 + $0x30] sm:$0xf]
    %v239 = vld [vmem:[#allocation8 + $0x34] sm:$0xf]
    %v240 = vld [vmem:[#allocation8 + $0x38] sm:$0xf]
    %v241 = vld [vmem:[#allocation8 + $0x3c] sm:$0xf]
    %v242 = vld [vmem:[%s5] sm:$0x1]
    %v244 = vperm.slane %v242, 0
    %v262 = vunpack.c.l.b16 %v226
    %v263 = vunpack.c.l.b16 %v227
    %v264 = vunpack.c.l.b16 %v228
    %v265 = vunpack.c.l.b16 %v229
    %v266 = vunpack.c.l.b16 %v230
    %v267 = vunpack.c.l.b16 %v231
    %v268 = vunpack.c.l.b16 %v232
    %v269 = vunpack.c.l.b16 %v233
    %v270 = vunpack.c.l.b16 %v234
    %v271 = vunpack.c.l.b16 %v235
    %v272 = vunpack.c.l.b16 %v236
    %v273 = vunpack.c.l.b16 %v237
    %v274 = vunpack.c.l.b16 %v238
    %v275 = vunpack.c.l.b16 %v239
    %v276 = vunpack.c.l.b16 %v240
    %v277 = vunpack.c.l.b16 %v241
    %v278 = vpack.c.b16 %v263, %v262
    %v279 = vpack.c.b16 %v265, %v264
    %v280 = vpack.c.b16 %v267, %v266
    %v281 = vpack.c.b16 %v269, %v268
    %v282 = vpack.c.b16 %v271, %v270
    %v283 = vpack.c.b16 %v273, %v272
    %v284 = vpack.c.b16 %v275, %v274
    %v285 = vpack.c.b16 %v277, %v276
    %294 = vmatpush.bf16.msra.mxu0 %v285
    %295 = vmatpush.bf16.msra.mxu0 %v284
    %296 = vmatpush.bf16.msra.mxu0 %v283
    %297 = vmatpush.bf16.msra.mxu0 %v282
    %298 = vmatpush.bf16.msra.mxu0 %v281
    %299 = vmatpush.bf16.msra.mxu0 %v280
    %300 = vmatpush.bf16.msra.mxu0 %v279
    %301 = vmatpush.bf16.msra.mxu0 %v278
    %302 = vmatmul.bf16.gmra.mxu0 %v222
    %v303 = vpop.f32.mrf.mxu0
    %v304 = vadd.f32 %v244, %v303
    %v305 = vpop.f32.mrf.mxu0
    %v306 = vadd.f32 %v244, %v305
    %307 = vmatmul.bf16.gmra.mxu0 %v223
    %v308 = vpop.f32.mrf.mxu0
    %v309 = vadd.f32 %v244, %v308
    %v310 = vpop.f32.mrf.mxu0
    %v311 = vadd.f32 %v244, %v310
    %312 = vmatmul.bf16.gmra.mxu0 %v224
    %v313 = vpop.f32.mrf.mxu0
    %v314 = vadd.f32 %v244, %v313
    %v315 = vpop.f32.mrf.mxu0
    %v316 = vadd.f32 %v244, %v315
    %317 = vmatmul.bf16.gmra.mxu0 %v225
    %v318 = vpop.f32.mrf.mxu0
    %v319 = vadd.f32 %v244, %v318
    %v320 = vpop.f32.mrf.mxu0
    %v321 = vadd.f32 %v244, %v320
    %322 = vdwg.mxu0
    %v323 = vmax.f32 %v304, 0.0
    %v324 = vmax.f32 %v306, 0.0
    %v325 = vmax.f32 %v309, 0.0
    %v326 = vmax.f32 %v311, 0.0
    %v327 = vmax.f32 %v314, 0.0
    %v328 = vmax.f32 %v316, 0.0
    %v329 = vmax.f32 %v319, 0.0
    %v330 = vmax.f32 %v321, 0.0
    %331 = vst [vmem:[#allocation10] sm:$0xff] %v323
    %332 = vst [vmem:[#allocation10 + $0x8] sm:$0xff] %v324
    %333 = vst [vmem:[#allocation10 + $0x10] sm:$0xff] %v325
    %334 = vst [vmem:[#allocation10 + $0x18] sm:$0xff] %v326
    %335 = vst [vmem:[#allocation10 + $0x20] sm:$0xff] %v327
    %336 = vst [vmem:[#allocation10 + $0x28] sm:$0xff] %v328
    %337 = vst [vmem:[#allocation10 + $0x30] sm:$0xff] %v329
    %338 = vst [vmem:[#allocation10 + $0x38] sm:$0xff] %v330
    %v339 = vpack.c.bf16 %v323, %v323
    %v340 = vpack.c.bf16 %v324, %v324
    %v341 = vpack.c.bf16 %v325, %v325
    %v342 = vpack.c.bf16 %v326, %v326
    %v343 = vpack.c.bf16 %v327, %v327
    %v344 = vpack.c.bf16 %v328, %v328
    %v345 = vpack.c.bf16 %v329, %v329
    %v346 = vpack.c.bf16 %v330, %v330
    %347 = vst [vmem:[#allocation11] sm:$0xf] %v339
    %348 = vst [vmem:[#allocation11 + $0x4] sm:$0xf] %v340
    %349 = vst [vmem:[#allocation11 + $0x8] sm:$0xf] %v341
    %350 = vst [vmem:[#allocation11 + $0xc] sm:$0xf] %v342
    %351 = vst [vmem:[#allocation11 + $0x10] sm:$0xf] %v343
    %352 = vst [vmem:[#allocation11 + $0x14] sm:$0xf] %v344
    %353 = vst [vmem:[#allocation11 + $0x18] sm:$0xf] %v345
    %354 = vst [vmem:[#allocation11 + $0x1c] sm:$0xf] %v346
    // Predicated region
    $region42: #{tpu_custom_call.1} parent=1 // pred_check
      _
    $region43: #{tpu_custom_call.1} parent=1 // pred_check_branch
      %356 = sbr.rel (0) target = $region45
    $region44: #{tpu_custom_call.1} parent=1 // pred_region
      %358 = vsyncadd [#allocation4], 0
      %s359 = sshll.u32 [#allocation10], 4
      %s360 = int_to_ptr.vmem [resolvable:$true] %s359
      %s361 = sshll.u32 %s6, 4
      %s362 = int_to_ptr.hbm [resolvable:$true] %s361
      %367 = dma.vmem_to_hbm [thread:$0]  %s360, 1024, %s362, [#allocation4], 128, 128, 8
    $region45: #{tpu_custom_call.1} parent=1 // pred_fallthru
      _
    // Predicated region
    $region46: #{tpu_custom_call.1} parent=1 // pred_check
      _
    $region47: #{tpu_custom_call.1} parent=1 // pred_check_branch
      %369 = sbr.rel (0) target = $region49
    $region48: #{tpu_custom_call.1} parent=1 // pred_region
      %371 = vsyncadd [#allocation12], 0
      %s372 = sshll.u32 [#allocation11], 4
      %s373 = int_to_ptr.vmem [resolvable:$true] %s372
      %s374 = sshll.u32 %s7, 4
      %s375 = int_to_ptr.hbm [resolvable:$true] %s374
      %380 = dma.vmem_to_hbm [thread:$0]  %s373, 512, %s375, [#allocation12], 64, 64, 4
    $region49: #{tpu_custom_call.1} parent=1 // pred_fallthru
      _
    // Predicated region
    $region50: #{tpu_custom_call.1} parent=1 // pred_check
      _
    $region51: #{tpu_custom_call.1} parent=1 // pred_check_branch
      %382 = sbr.rel (0) target = $region53
    $region52: #{tpu_custom_call.1} parent=1 // pred_region
      %384 = dma.done [#allocation4], 1024
    $region53: #{tpu_custom_call.1} parent=1 // pred_fallthru
      _
    // Predicated region
    $region54: #{tpu_custom_call.1} parent=1 // pred_check
      _
    $region55: #{tpu_custom_call.1} parent=1 // pred_check_branch
      %386 = sbr.rel (0) target = $region57
    $region56: #{tpu_custom_call.1} parent=1 // pred_region
      %388 = dma.done [#allocation12], 512
    $region57: #{tpu_custom_call.1} parent=1 // pred_fallthru
      _
    %389 = vsyncpa [#allocation3], 1
    %390 = vsyncpa [#allocation6], 1
    %391 = vsyncpa [#allocation9], 1
    %392 = vsyncpa [#allocation4], 1
    %393 = vsyncpa [#allocation12], 1

</llo_original>
